<compile_context>
chip_gen: v6e
topology: v6e:2x2x1
jax: 0.10.0
libtpu: 0.0.40
codegen_flags: <defaults>
</compile_context>

<pallas_src>
import functools

import jax
import jax.numpy as jnp
import numpy as np
from jax.experimental import pallas as pl
from jax.experimental.pallas import tpu as pltpu


def _layernorm_kernel(x_ref, w_ref, b_ref, o_ref, *, eps):
    x = x_ref[...]                                        # [TM, C] f32
    c = x.shape[-1]
    inv_c = 1.0 / c
    # Single-pass row statistics over the channel (lane) axis.
    s = jnp.sum(x, axis=-1, keepdims=True)                # [TM, 1]
    s2 = jnp.sum(x * x, axis=-1, keepdims=True)           # [TM, 1]
    mu = s * inv_c
    var = jnp.maximum(s2 * inv_c - mu * mu, 0.0)          # guard fp cancellation
    inv = jax.lax.rsqrt(var + eps)
    # Fused normalize + per-channel affine.
    o_ref[...] = ((x - mu) * inv) * w_ref[...] + b_ref[...]


def _layer_norm_2d(x2d, weight, bias, eps):
    """x2d: [M, C] f32, normalize each row over C. Returns [M, C]."""
    M, C = x2d.shape
    # ~1 MiB of f32 rows per block, multiple of 8 sublanes.
    target_rows = max(8, (1 << 20) // (4 * C))
    tm = max(8, (min(target_rows, M) // 8) * 8)
    m_pad = pl.cdiv(M, tm) * tm
    if m_pad != M:
        x2d = jnp.pad(x2d, ((0, m_pad - M), (0, 0)))

    out = pl.pallas_call(
        functools.partial(_layernorm_kernel, eps=eps),
        out_shape=jax.ShapeDtypeStruct((m_pad, C), x2d.dtype),
        grid=(m_pad // tm,),
        in_specs=[
            pl.BlockSpec((tm, C), lambda i: (i, 0)),
            pl.BlockSpec((1, C), lambda i: (0, 0)),
            pl.BlockSpec((1, C), lambda i: (0, 0)),
        ],
        out_specs=pl.BlockSpec((tm, C), lambda i: (i, 0)),
        compiler_params=pltpu.CompilerParams(
            dimension_semantics=("parallel",),
            vmem_limit_bytes=32 * 1024 * 1024,
        ),
    )(x2d,
      weight.reshape(1, C).astype(x2d.dtype),
      bias.reshape(1, C).astype(x2d.dtype))
    return out[:M]


def layer_norm(x, weight, bias, eps=1e-6, data_format="channels_last"):
    """Forward pass of the LayerNorm module.

    channels_last:  x = [..., C], F.layer_norm over the last dim.
    channels_first: x = [B, C, H, W], normalize over dim 1.
    """
    if data_format == "channels_last":
        C = x.shape[-1]
        lead = x.shape[:-1]
        y2d = _layer_norm_2d(x.reshape(-1, C), weight, bias, eps)
        return y2d.reshape(*lead, C)
    elif data_format == "channels_first":
        B, C, H, W = x.shape
        x2d = jnp.transpose(x, (0, 2, 3, 1)).reshape(B * H * W, C)
        y2d = _layer_norm_2d(x2d, weight, bias, eps)
        return jnp.transpose(y2d.reshape(B, H, W, C), (0, 3, 1, 2))
    else:
        raise NotImplementedError(data_format)


# ----------------------------- pure-JAX references -----------------------------
def _ref_channels_last(x, w, b, eps):
    mu = jnp.mean(x, axis=-1, keepdims=True)
    var = jnp.mean((x - mu) ** 2, axis=-1, keepdims=True)
    return (x - mu) / jnp.sqrt(var + eps) * w + b


def _ref_channels_first(x, w, b, eps):
    u = jnp.mean(x, axis=1, keepdims=True)
    s = jnp.mean((x - u) ** 2, axis=1, keepdims=True)
    xn = (x - u) / jnp.sqrt(s + eps)
    return w[None, :, None, None] * xn + b[None, :, None, None]


if __name__ == "__main__":
    key = jax.random.PRNGKey(0)
    kx1, kx2, kx3, kw, kb, kw2, kb2 = jax.random.split(key, 7)

    C = 128  # lane-dense channel count (multiple of 128)
    eps = 1e-6

    x_cf = jax.random.normal(kx1, (2, C, 16, 16), jnp.float32)   # channels_first
    x_cl = jax.random.normal(kx2, (2, 16, 16, C), jnp.float32)   # channels_last
    weight = 1.0 + 0.1 * jax.random.normal(kw, (C,), jnp.float32)
    bias = 0.05 * jax.random.normal(kb, (C,), jnp.float32)

    out_cf = jax.block_until_ready(
        layer_norm(x_cf, weight, bias, eps=eps, data_format="channels_first"))
    out_cl = jax.block_until_ready(
        layer_norm(x_cl, weight, bias, eps=eps, data_format="channels_last"))

    np.testing.assert_allclose(np.asarray(out_cf),
                               np.asarray(_ref_channels_first(x_cf, weight, bias, eps)),
                               rtol=1e-4, atol=1e-4)
    np.testing.assert_allclose(np.asarray(out_cl),
                               np.asarray(_ref_channels_last(x_cl, weight, bias, eps)),
                               rtol=1e-4, atol=1e-4)

    # Ragged case: C not a multiple of 128 and M not a multiple of the tile
    # (exercises full-dim block exemption + row padding path).
    C2 = 96
    x_rag = jax.random.normal(kx3, (3, 5, 2, C2), jnp.float32)
    w2 = 1.0 + 0.1 * jax.random.normal(kw2, (C2,), jnp.float32)
    b2 = 0.05 * jax.random.normal(kb2, (C2,), jnp.float32)
    out_rag = jax.block_until_ready(
        layer_norm(x_rag, w2, b2, eps=eps, data_format="channels_last"))
    np.testing.assert_allclose(np.asarray(out_rag),
                               np.asarray(_ref_channels_last(x_rag, w2, b2, eps)),
                               rtol=1e-4, atol=1e-4)

    assert out_cf.shape == x_cf.shape and out_cf.dtype == jnp.float32
    assert out_cl.shape == x_cl.shape and out_cl.dtype == jnp.float32
    assert out_rag.shape == x_rag.shape and out_rag.dtype == jnp.float32
    print("KERNEL_OK")
</pallas_src>

<mosaic_0001>
module attributes {stable_mosaic.version = 11 : i64} {
  func.func @_layernorm_kernel(%arg0: i32, %arg1: memref<512x128xf32, #tpu.memory_space<vmem>>, %arg2: memref<1x128xf32, #tpu.memory_space<vmem>>, %arg3: memref<1x128xf32, #tpu.memory_space<vmem>>, %arg4: memref<512x128xf32, #tpu.memory_space<vmem>>) attributes {dimension_semantics = [#tpu.dimension_semantics<parallel>], iteration_bounds = array<i64: 1>, scalar_prefetch = 0 : i64, scratch_operands = 0 : i64, tpu.core_type = #tpu.core_type<tc>, window_params = [{transform_indices = @transform_0, window_bounds = array<i64: 512, 128>}, {pipeline_mode = #tpu.pipeline_mode<synchronous>, transform_indices = @transform_1, window_bounds = array<i64: 1, 128>}, {pipeline_mode = #tpu.pipeline_mode<synchronous>, transform_indices = @transform_2, window_bounds = array<i64: 1, 128>}, {transform_indices = @transform_3, window_bounds = array<i64: 512, 128>}]} {
    %c0 = arith.constant 0 : index
    %c0_0 = arith.constant 0 : index
    %0 = vector.load %arg1[%c0, %c0_0] : memref<512x128xf32, #tpu.memory_space<vmem>>, vector<512x128xf32>
    %cst = arith.constant dense<0.000000e+00> : vector<512xf32>
    %1 = vector.multi_reduction <add>, %0, %cst [1] : vector<512x128xf32> to vector<512xf32>
    %2 = vector.shape_cast %1 : vector<512xf32> to vector<512x1xf32>
    %3 = arith.mulf %0, %0 : vector<512x128xf32>
    %cst_1 = arith.constant dense<0.000000e+00> : vector<512xf32>
    %4 = vector.multi_reduction <add>, %3, %cst_1 [1] : vector<512x128xf32> to vector<512xf32>
    %5 = vector.shape_cast %4 : vector<512xf32> to vector<512x1xf32>
    %cst_2 = arith.constant 7.812500e-03 : f32
    %6 = vector.broadcast %cst_2 : f32 to vector<512x1xf32>
    %7 = arith.mulf %2, %6 : vector<512x1xf32>
    %cst_3 = arith.constant 7.812500e-03 : f32
    %8 = vector.broadcast %cst_3 : f32 to vector<512x1xf32>
    %9 = arith.mulf %5, %8 : vector<512x1xf32>
    %10 = arith.mulf %7, %7 : vector<512x1xf32>
    %11 = arith.subf %9, %10 : vector<512x1xf32>
    %cst_4 = arith.constant 0.000000e+00 : f32
    %12 = vector.broadcast %cst_4 : f32 to vector<512x1xf32>
    %13 = arith.maximumf %11, %12 : vector<512x1xf32>
    %cst_5 = arith.constant 9.99999997E-7 : f32
    %14 = vector.broadcast %cst_5 : f32 to vector<512x1xf32>
    %15 = arith.addf %13, %14 : vector<512x1xf32>
    %16 = math.rsqrt %15 : vector<512x1xf32>
    %17 = vector.broadcast %7 : vector<512x1xf32> to vector<512x128xf32>
    %18 = arith.subf %0, %17 : vector<512x128xf32>
    %19 = vector.broadcast %16 : vector<512x1xf32> to vector<512x128xf32>
    %20 = arith.mulf %18, %19 : vector<512x128xf32>
    %c0_6 = arith.constant 0 : index
    %c0_7 = arith.constant 0 : index
    %21 = vector.load %arg2[%c0_6, %c0_7] : memref<1x128xf32, #tpu.memory_space<vmem>>, vector<1x128xf32>
    %22 = vector.broadcast %21 : vector<1x128xf32> to vector<512x128xf32>
    %23 = arith.mulf %20, %22 : vector<512x128xf32>
    %c0_8 = arith.constant 0 : index
    %c0_9 = arith.constant 0 : index
    %24 = vector.load %arg3[%c0_8, %c0_9] : memref<1x128xf32, #tpu.memory_space<vmem>>, vector<1x128xf32>
    %25 = vector.broadcast %24 : vector<1x128xf32> to vector<512x128xf32>
    %26 = arith.addf %23, %25 : vector<512x128xf32>
    %c0_10 = arith.constant 0 : index
    %c0_11 = arith.constant 0 : index
    %27 = vector.load %arg4[%c0_10, %c0_11] : memref<512x128xf32, #tpu.memory_space<vmem>>, vector<512x128xf32>
    tpu.vector_store %arg4[%c0_10, %c0_11], %26 {strides = array<i32>} : memref<512x128xf32, #tpu.memory_space<vmem>>, vector<512x128xf32>,
    return
  }
  func.func @transform_0(%arg0: i32) -> (i32, i32) {
    %c0_i32 = arith.constant 0 : i32
    %c0_i32_0 = arith.constant 0 : i32
    return %arg0, %c0_i32 : i32, i32
  }
  func.func @transform_1(%arg0: i32) -> (i32, i32) {
    %c0_i32 = arith.constant 0 : i32
    %c0_i32_0 = arith.constant 0 : i32
    %c0_i32_1 = arith.constant 0 : i32
    return %c0_i32, %c0_i32_0 : i32, i32
  }
  func.func @transform_2(%arg0: i32) -> (i32, i32) {
    %c0_i32 = arith.constant 0 : i32
    %c0_i32_0 = arith.constant 0 : i32
    %c0_i32_1 = arith.constant 0 : i32
    return %c0_i32, %c0_i32_0 : i32, i32
  }
  func.func @transform_3(%arg0: i32) -> (i32, i32) {
    %c0_i32 = arith.constant 0 : i32
    %c0_i32_0 = arith.constant 0 : i32
    return %arg0, %c0_i32 : i32, i32
  }
}

</mosaic_0001>

<llo_original>
// kernel: tpu_custom_call.1
$region0: #{tpu_custom_call.1}
  #allocation0 [shape = 'u32[]', space=smem, size = 0x4, offset = 0x4, fixed_abs, tag = 'smem constant byte address 0x4 - core index']
  #allocation1 [shape = 'u32[144,128]{1,0:T(1,128)}', space=vmem, size = 0x12000, scoped, tag = 'internal scratch']
  %s0 = inlined_call_operand.hbm [shape: f32[512,128], index: 0, kind: input, shape index: {}]
  %s1 = inlined_call_operand.vmem [shape: f32[1,128], index: 1, kind: input, shape index: {}]
  %s2 = inlined_call_operand.vmem [shape: f32[1,128], index: 2, kind: input, shape index: {}]
  %s3 = inlined_call_operand.hbm [shape: f32[512,128], index: 3, kind: output, shape index: {}]
  %s4 = sld [smem:[#allocation0]]
  $region26: #{tpu_custom_call.1} parent=0
    _
  %s6 = ssub.s32 1, %s4
  %s7 = scalar_select 0, %s6, %s4
  $region1: #{tpu_custom_call.1} parent=0
    #allocation2 [shape = 'u8[262144]{0}', space=vmem, size = 0x40000, scoped, tag = 'input window, operand 0, single buffered']
    #allocation3 [shape = 's32[1]{0}', space=sflag, size = 0x4, scoped, tag = 'scoped memory for tpu_custom_call.1']
    #allocation4 [shape = 's32[1]{0}', space=sflag, size = 0x4, scoped, tag = 'scoped memory for tpu_custom_call.1']
    #allocation5 [shape = 'u8[262144]{0}', space=vmem, size = 0x40000, scoped, tag = 'output window, operand 0, single buffered']
    %8 = vsyncpa [#allocation3], 0
    %9 = vsyncpa [#allocation4], 0
    // Predicated region
    $region2: #{tpu_custom_call.1} parent=1 // pred_check
      _
    $region3: #{tpu_custom_call.1} parent=1 // pred_check_branch
      %11 = sbr.rel (0) target = $region5
    $region4: #{tpu_custom_call.1} parent=1 // pred_region
      %s13 = ssub.s32 8192, 8192
      %14 = vsyncadd [#allocation3], %s13
      %s15 = sshll.u32 [#allocation2], 4
      %s16 = int_to_ptr.vmem [resolvable:$true] %s15
      %21 = dma.hbm_to_vmem [thread:$0]  %s0, 8192, %s16, [#allocation3], 128, 128, 8
    $region5: #{tpu_custom_call.1} parent=1 // pred_fallthru
      _
    // Predicated region
    $region6: #{tpu_custom_call.1} parent=1 // pred_check
      _
    $region7: #{tpu_custom_call.1} parent=1 // pred_check_branch
      %23 = sbr.rel (0) target = $region9
    $region8: #{tpu_custom_call.1} parent=1 // pred_region
      _
    $region9: #{tpu_custom_call.1} parent=1 // pred_fallthru
      _
    // Predicated region
    $region10: #{tpu_custom_call.1} parent=1 // pred_check
      _
    $region11: #{tpu_custom_call.1} parent=1 // pred_check_branch
      %25 = sbr.rel (0) target = $region13
    $region12: #{tpu_custom_call.1} parent=1 // pred_region
      _
    $region13: #{tpu_custom_call.1} parent=1 // pred_fallthru
      _
    // Predicated region
    $region14: #{tpu_custom_call.1} parent=1 // pred_check
      _
    $region15: #{tpu_custom_call.1} parent=1 // pred_check_branch
      %27 = sbr.rel (0) target = $region17
    $region16: #{tpu_custom_call.1} parent=1 // pred_region
      %28 = dma.done [#allocation3], 8192
    $region17: #{tpu_custom_call.1} parent=1 // pred_fallthru
      _
    %v29 = vld [vmem:[#allocation2] sm:$0xff]
    %v30 = vld [vmem:[#allocation2 + $0x8] sm:$0xff]
    %v31 = vld [vmem:[#allocation2 + $0x10] sm:$0xff]
    %v32 = vld [vmem:[#allocation2 + $0x18] sm:$0xff]
    %v33 = vld [vmem:[#allocation2 + $0x20] sm:$0xff]
    %v34 = vld [vmem:[#allocation2 + $0x28] sm:$0xff]
    %v35 = vld [vmem:[#allocation2 + $0x30] sm:$0xff]
    %v36 = vld [vmem:[#allocation2 + $0x38] sm:$0xff]
    %v37 = vld [vmem:[#allocation2 + $0x40] sm:$0xff]
    %v38 = vld [vmem:[#allocation2 + $0x48] sm:$0xff]
    %v39 = vld [vmem:[#allocation2 + $0x50] sm:$0xff]
    %v40 = vld [vmem:[#allocation2 + $0x58] sm:$0xff]
    %v41 = vld [vmem:[#allocation2 + $0x60] sm:$0xff]
    %v42 = vld [vmem:[#allocation2 + $0x68] sm:$0xff]
    %v43 = vld [vmem:[#allocation2 + $0x70] sm:$0xff]
    %v44 = vld [vmem:[#allocation2 + $0x78] sm:$0xff]
    %v45 = vld [vmem:[#allocation2 + $0x80] sm:$0xff]
    %v46 = vld [vmem:[#allocation2 + $0x88] sm:$0xff]
    %v47 = vld [vmem:[#allocation2 + $0x90] sm:$0xff]
    %v48 = vld [vmem:[#allocation2 + $0x98] sm:$0xff]
    %v49 = vld [vmem:[#allocation2 + $0xa0] sm:$0xff]
    %v50 = vld [vmem:[#allocation2 + $0xa8] sm:$0xff]
    %v51 = vld [vmem:[#allocation2 + $0xb0] sm:$0xff]
    %v52 = vld [vmem:[#allocation2 + $0xb8] sm:$0xff]
    %v53 = vld [vmem:[#allocation2 + $0xc0] sm:$0xff]
    %v54 = vld [vmem:[#allocation2 + $0xc8] sm:$0xff]
    %v55 = vld [vmem:[#allocation2 + $0xd0] sm:$0xff]
    %v56 = vld [vmem:[#allocation2 + $0xd8] sm:$0xff]
    %v57 = vld [vmem:[#allocation2 + $0xe0] sm:$0xff]
    %v58 = vld [vmem:[#allocation2 + $0xe8] sm:$0xff]
    %v59 = vld [vmem:[#allocation2 + $0xf0] sm:$0xff]
    %v60 = vld [vmem:[#allocation2 + $0xf8] sm:$0xff]
    %v61 = vld [vmem:[#allocation2 + $0x100] sm:$0xff]
    %v62 = vld [vmem:[#allocation2 + $0x108] sm:$0xff]
    %v63 = vld [vmem:[#allocation2 + $0x110] sm:$0xff]
    %v64 = vld [vmem:[#allocation2 + $0x118] sm:$0xff]
    %v65 = vld [vmem:[#allocation2 + $0x120] sm:$0xff]
    %v66 = vld [vmem:[#allocation2 + $0x128] sm:$0xff]
    %v67 = vld [vmem:[#allocation2 + $0x130] sm:$0xff]
    %v68 = vld [vmem:[#allocation2 + $0x138] sm:$0xff]
    %v69 = vld [vmem:[#allocation2 + $0x140] sm:$0xff]
    %v70 = vld [vmem:[#allocation2 + $0x148] sm:$0xff]
    %v71 = vld [vmem:[#allocation2 + $0x150] sm:$0xff]
    %v72 = vld [vmem:[#allocation2 + $0x158] sm:$0xff]
    %v73 = vld [vmem:[#allocation2 + $0x160] sm:$0xff]
    %v74 = vld [vmem:[#allocation2 + $0x168] sm:$0xff]
    %v75 = vld [vmem:[#allocation2 + $0x170] sm:$0xff]
    %v76 = vld [vmem:[#allocation2 + $0x178] sm:$0xff]
    %v77 = vld [vmem:[#allocation2 + $0x180] sm:$0xff]
    %v78 = vld [vmem:[#allocation2 + $0x188] sm:$0xff]
    %v79 = vld [vmem:[#allocation2 + $0x190] sm:$0xff]
    %v80 = vld [vmem:[#allocation2 + $0x198] sm:$0xff]
    %v81 = vld [vmem:[#allocation2 + $0x1a0] sm:$0xff]
    %v82 = vld [vmem:[#allocation2 + $0x1a8] sm:$0xff]
    %v83 = vld [vmem:[#allocation2 + $0x1b0] sm:$0xff]
    %v84 = vld [vmem:[#allocation2 + $0x1b8] sm:$0xff]
    %v85 = vld [vmem:[#allocation2 + $0x1c0] sm:$0xff]
    %v86 = vld [vmem:[#allocation2 + $0x1c8] sm:$0xff]
    %v87 = vld [vmem:[#allocation2 + $0x1d0] sm:$0xff]
    %v88 = vld [vmem:[#allocation2 + $0x1d8] sm:$0xff]
    %v89 = vld [vmem:[#allocation2 + $0x1e0] sm:$0xff]
    %v90 = vld [vmem:[#allocation2 + $0x1e8] sm:$0xff]
    %v91 = vld [vmem:[#allocation2 + $0x1f0] sm:$0xff]
    %v92 = vld [vmem:[#allocation2 + $0x1f8] sm:$0xff]
    %93 = vadd.xlane.f32.xlu0 %v29
    %v94 = vpop.xlane.xlu0 %93
    %95 = vadd.xlane.f32.xlu0 %v30
    %v96 = vpop.xlane.xlu0 %95
    %97 = vadd.xlane.f32.xlu0 %v31
    %v98 = vpop.xlane.xlu0 %97
    %99 = vadd.xlane.f32.xlu0 %v32
    %v100 = vpop.xlane.xlu0 %99
    %101 = vadd.xlane.f32.xlu0 %v33
    %v102 = vpop.xlane.xlu0 %101
    %103 = vadd.xlane.f32.xlu0 %v34
    %v104 = vpop.xlane.xlu0 %103
    %105 = vadd.xlane.f32.xlu0 %v35
    %v106 = vpop.xlane.xlu0 %105
    %107 = vadd.xlane.f32.xlu0 %v36
    %v108 = vpop.xlane.xlu0 %107
    %109 = vadd.xlane.f32.xlu0 %v37
    %v110 = vpop.xlane.xlu0 %109
    %111 = vadd.xlane.f32.xlu0 %v38
    %v112 = vpop.xlane.xlu0 %111
    %113 = vadd.xlane.f32.xlu0 %v39
    %v114 = vpop.xlane.xlu0 %113
    %115 = vadd.xlane.f32.xlu0 %v40
    %v116 = vpop.xlane.xlu0 %115
    %117 = vadd.xlane.f32.xlu0 %v41
    %v118 = vpop.xlane.xlu0 %117
    %119 = vadd.xlane.f32.xlu0 %v42
    %v120 = vpop.xlane.xlu0 %119
    %121 = vadd.xlane.f32.xlu0 %v43
    %v122 = vpop.xlane.xlu0 %121
    %123 = vadd.xlane.f32.xlu0 %v44
    %v124 = vpop.xlane.xlu0 %123
    %125 = vadd.xlane.f32.xlu0 %v45
    %v126 = vpop.xlane.xlu0 %125
    %127 = vadd.xlane.f32.xlu0 %v46
    %v128 = vpop.xlane.xlu0 %127
    %129 = vadd.xlane.f32.xlu0 %v47
    %v130 = vpop.xlane.xlu0 %129
    %131 = vadd.xlane.f32.xlu0 %v48
    %v132 = vpop.xlane.xlu0 %131
    %133 = vadd.xlane.f32.xlu0 %v49
    %v134 = vpop.xlane.xlu0 %133
    %135 = vadd.xlane.f32.xlu0 %v50
    %v136 = vpop.xlane.xlu0 %135
    %137 = vadd.xlane.f32.xlu0 %v51
    %v138 = vpop.xlane.xlu0 %137
    %139 = vadd.xlane.f32.xlu0 %v52
    %v140 = vpop.xlane.xlu0 %139
    %141 = vadd.xlane.f32.xlu0 %v53
    %v142 = vpop.xlane.xlu0 %141
    %143 = vadd.xlane.f32.xlu0 %v54
    %v144 = vpop.xlane.xlu0 %143
    %145 = vadd.xlane.f32.xlu0 %v55
    %v146 = vpop.xlane.xlu0 %145
    %147 = vadd.xlane.f32.xlu0 %v56
    %v148 = vpop.xlane.xlu0 %147
    %149 = vadd.xlane.f32.xlu0 %v57
    %v150 = vpop.xlane.xlu0 %149
    %151 = vadd.xlane.f32.xlu0 %v58
    %v152 = vpop.xlane.xlu0 %151
    %153 = vadd.xlane.f32.xlu0 %v59
    %v154 = vpop.xlane.xlu0 %153
    %155 = vadd.xlane.f32.xlu0 %v60
    %v156 = vpop.xlane.xlu0 %155
    %157 = vadd.xlane.f32.xlu0 %v61
    %v158 = vpop.xlane.xlu0 %157
    %159 = vadd.xlane.f32.xlu0 %v62
    %v160 = vpop.xlane.xlu0 %159
    %161 = vadd.xlane.f32.xlu0 %v63
    %v162 = vpop.xlane.xlu0 %161
    %163 = vadd.xlane.f32.xlu0 %v64
    %v164 = vpop.xlane.xlu0 %163
    %165 = vadd.xlane.f32.xlu0 %v65
    %v166 = vpop.xlane.xlu0 %165
    %167 = vadd.xlane.f32.xlu0 %v66
    %v168 = vpop.xlane.xlu0 %167
    %169 = vadd.xlane.f32.xlu0 %v67
    %v170 = vpop.xlane.xlu0 %169
    %171 = vadd.xlane.f32.xlu0 %v68
    %v172 = vpop.xlane.xlu0 %171
    %173 = vadd.xlane.f32.xlu0 %v69
    %v174 = vpop.xlane.xlu0 %173
    %175 = vadd.xlane.f32.xlu0 %v70
    %v176 = vpop.xlane.xlu0 %175
    %177 = vadd.xlane.f32.xlu0 %v71
    %v178 = vpop.xlane.xlu0 %177
    %179 = vadd.xlane.f32.xlu0 %v72
    %v180 = vpop.xlane.xlu0 %179
    %181 = vadd.xlane.f32.xlu0 %v73
    %v182 = vpop.xlane.xlu0 %181
    %183 = vadd.xlane.f32.xlu0 %v74
    %v184 = vpop.xlane.xlu0 %183
    %185 = vadd.xlane.f32.xlu0 %v75
    %v186 = vpop.xlane.xlu0 %185
    %187 = vadd.xlane.f32.xlu0 %v76
    %v188 = vpop.xlane.xlu0 %187
    %189 = vadd.xlane.f32.xlu0 %v77
    %v190 = vpop.xlane.xlu0 %189
    %191 = vadd.xlane.f32.xlu0 %v78
    %v192 = vpop.xlane.xlu0 %191
    %193 = vadd.xlane.f32.xlu0 %v79
    %v194 = vpop.xlane.xlu0 %193
    %195 = vadd.xlane.f32.xlu0 %v80
    %v196 = vpop.xlane.xlu0 %195
    %197 = vadd.xlane.f32.xlu0 %v81
    %v198 = vpop.xlane.xlu0 %197
    %199 = vadd.xlane.f32.xlu0 %v82
    %v200 = vpop.xlane.xlu0 %199
    %201 = vadd.xlane.f32.xlu0 %v83
    %v202 = vpop.xlane.xlu0 %201
    %203 = vadd.xlane.f32.xlu0 %v84
    %v204 = vpop.xlane.xlu0 %203
    %205 = vadd.xlane.f32.xlu0 %v85
    %v206 = vpop.xlane.xlu0 %205
    %207 = vadd.xlane.f32.xlu0 %v86
    %v208 = vpop.xlane.xlu0 %207
    %209 = vadd.xlane.f32.xlu0 %v87
    %v210 = vpop.xlane.xlu0 %209
    %211 = vadd.xlane.f32.xlu0 %v88
    %v212 = vpop.xlane.xlu0 %211
    %213 = vadd.xlane.f32.xlu0 %v89
    %v214 = vpop.xlane.xlu0 %213
    %215 = vadd.xlane.f32.xlu0 %v90
    %v216 = vpop.xlane.xlu0 %215
    %217 = vadd.xlane.f32.xlu0 %v91
    %v218 = vpop.xlane.xlu0 %217
    %219 = vadd.xlane.f32.xlu0 %v92
    %v220 = vpop.xlane.xlu0 %219
    %v221 = vmul.f32 %v29, %v29
    %v222 = vmul.f32 %v30, %v30
    %v223 = vmul.f32 %v31, %v31
    %v224 = vmul.f32 %v32, %v32
    %v225 = vmul.f32 %v33, %v33
    %v226 = vmul.f32 %v34, %v34
    %v227 = vmul.f32 %v35, %v35
    %v228 = vmul.f32 %v36, %v36
    %v229 = vmul.f32 %v37, %v37
    %v230 = vmul.f32 %v38, %v38
    %v231 = vmul.f32 %v39, %v39
    %v232 = vmul.f32 %v40, %v40
    %v233 = vmul.f32 %v41, %v41
    %v234 = vmul.f32 %v42, %v42
    %v235 = vmul.f32 %v43, %v43
    %v236 = vmul.f32 %v44, %v44
    %v237 = vmul.f32 %v45, %v45
    %v238 = vmul.f32 %v46, %v46
    %v239 = vmul.f32 %v47, %v47
    %v240 = vmul.f32 %v48, %v48
    %v241 = vmul.f32 %v49, %v49
    %v242 = vmul.f32 %v50, %v50
    %v243 = vmul.f32 %v51, %v51
    %v244 = vmul.f32 %v52, %v52
    %v245 = vmul.f32 %v53, %v53
    %v246 = vmul.f32 %v54, %v54
    %v247 = vmul.f32 %v55, %v55
    %v248 = vmul.f32 %v56, %v56
    %v249 = vmul.f32 %v57, %v57
    %v250 = vmul.f32 %v58, %v58
    %v251 = vmul.f32 %v59, %v59
    %v252 = vmul.f32 %v60, %v60
    %v253 = vmul.f32 %v61, %v61
    %v254 = vmul.f32 %v62, %v62
    %v255 = vmul.f32 %v63, %v63
    %v256 = vmul.f32 %v64, %v64
    %v257 = vmul.f32 %v65, %v65
    %v258 = vmul.f32 %v66, %v66
    %v259 = vmul.f32 %v67, %v67
    %v260 = vmul.f32 %v68, %v68
    %v261 = vmul.f32 %v69, %v69
    %v262 = vmul.f32 %v70, %v70
    %v263 = vmul.f32 %v71, %v71
    %v264 = vmul.f32 %v72, %v72
    %v265 = vmul.f32 %v73, %v73
    %v266 = vmul.f32 %v74, %v74
    %v267 = vmul.f32 %v75, %v75
    %v268 = vmul.f32 %v76, %v76
    %v269 = vmul.f32 %v77, %v77
    %v270 = vmul.f32 %v78, %v78
    %v271 = vmul.f32 %v79, %v79
    %v272 = vmul.f32 %v80, %v80
    %v273 = vmul.f32 %v81, %v81
    %v274 = vmul.f32 %v82, %v82
    %v275 = vmul.f32 %v83, %v83
    %v276 = vmul.f32 %v84, %v84
    %v277 = vmul.f32 %v85, %v85
    %v278 = vmul.f32 %v86, %v86
    %v279 = vmul.f32 %v87, %v87
    %v280 = vmul.f32 %v88, %v88
    %v281 = vmul.f32 %v89, %v89
    %v282 = vmul.f32 %v90, %v90
    %v283 = vmul.f32 %v91, %v91
    %v284 = vmul.f32 %v92, %v92
    %285 = vadd.xlane.f32.xlu0 %v221
    %v286 = vpop.xlane.xlu0 %285
    %287 = vadd.xlane.f32.xlu0 %v222
    %v288 = vpop.xlane.xlu0 %287
    %289 = vadd.xlane.f32.xlu0 %v223
    %v290 = vpop.xlane.xlu0 %289
    %291 = vadd.xlane.f32.xlu0 %v224
    %v292 = vpop.xlane.xlu0 %291
    %293 = vadd.xlane.f32.xlu0 %v225
    %v294 = vpop.xlane.xlu0 %293
    %295 = vadd.xlane.f32.xlu0 %v226
    %v296 = vpop.xlane.xlu0 %295
    %297 = vadd.xlane.f32.xlu0 %v227
    %v298 = vpop.xlane.xlu0 %297
    %299 = vadd.xlane.f32.xlu0 %v228
    %v300 = vpop.xlane.xlu0 %299
    %301 = vadd.xlane.f32.xlu0 %v229
    %v302 = vpop.xlane.xlu0 %301
    %303 = vadd.xlane.f32.xlu0 %v230
    %v304 = vpop.xlane.xlu0 %303
    %305 = vadd.xlane.f32.xlu0 %v231
    %v306 = vpop.xlane.xlu0 %305
    %307 = vadd.xlane.f32.xlu0 %v232
    %v308 = vpop.xlane.xlu0 %307
    %309 = vadd.xlane.f32.xlu0 %v233
    %v310 = vpop.xlane.xlu0 %309
    %311 = vadd.xlane.f32.xlu0 %v234
    %v312 = vpop.xlane.xlu0 %311
    %313 = vadd.xlane.f32.xlu0 %v235
    %v314 = vpop.xlane.xlu0 %313
    %315 = vadd.xlane.f32.xlu0 %v236
    %v316 = vpop.xlane.xlu0 %315
    %317 = vadd.xlane.f32.xlu0 %v237
    %v318 = vpop.xlane.xlu0 %317
    %319 = vadd.xlane.f32.xlu0 %v238
    %v320 = vpop.xlane.xlu0 %319
    %321 = vadd.xlane.f32.xlu0 %v239
    %v322 = vpop.xlane.xlu0 %321
    %323 = vadd.xlane.f32.xlu0 %v240
    %v324 = vpop.xlane.xlu0 %323
    %325 = vadd.xlane.f32.xlu0 %v241
    %v326 = vpop.xlane.xlu0 %325
    %327 = vadd.xlane.f32.xlu0 %v242
    %v328 = vpop.xlane.xlu0 %327
    %329 = vadd.xlane.f32.xlu0 %v243
    %v330 = vpop.xlane.xlu0 %329
    %331 = vadd.xlane.f32.xlu0 %v244
    %v332 = vpop.xlane.xlu0 %331
    %333 = vadd.xlane.f32.xlu0 %v245
    %v334 = vpop.xlane.xlu0 %333
    %335 = vadd.xlane.f32.xlu0 %v246
    %v336 = vpop.xlane.xlu0 %335
    %337 = vadd.xlane.f32.xlu0 %v247
    %v338 = vpop.xlane.xlu0 %337
    %339 = vadd.xlane.f32.xlu0 %v248
    %v340 = vpop.xlane.xlu0 %339
    %341 = vadd.xlane.f32.xlu0 %v249
    %v342 = vpop.xlane.xlu0 %341
    %343 = vadd.xlane.f32.xlu0 %v250
    %v344 = vpop.xlane.xlu0 %343
    %345 = vadd.xlane.f32.xlu0 %v251
    %v346 = vpop.xlane.xlu0 %345
    %347 = vadd.xlane.f32.xlu0 %v252
    %v348 = vpop.xlane.xlu0 %347
    %349 = vadd.xlane.f32.xlu0 %v253
    %v350 = vpop.xlane.xlu0 %349
    %351 = vadd.xlane.f32.xlu0 %v254
    %v352 = vpop.xlane.xlu0 %351
    %353 = vadd.xlane.f32.xlu0 %v255
    %v354 = vpop.xlane.xlu0 %353
    %355 = vadd.xlane.f32.xlu0 %v256
    %v356 = vpop.xlane.xlu0 %355
    %357 = vadd.xlane.f32.xlu0 %v257
    %v358 = vpop.xlane.xlu0 %357
    %359 = vadd.xlane.f32.xlu0 %v258
    %v360 = vpop.xlane.xlu0 %359
    %361 = vadd.xlane.f32.xlu0 %v259
    %v362 = vpop.xlane.xlu0 %361
    %363 = vadd.xlane.f32.xlu0 %v260
    %v364 = vpop.xlane.xlu0 %363
    %365 = vadd.xlane.f32.xlu0 %v261
    %v366 = vpop.xlane.xlu0 %365
    %367 = vadd.xlane.f32.xlu0 %v262
    %v368 = vpop.xlane.xlu0 %367
    %369 = vadd.xlane.f32.xlu0 %v263
    %v370 = vpop.xlane.xlu0 %369
    %371 = vadd.xlane.f32.xlu0 %v264
    %v372 = vpop.xlane.xlu0 %371
    %373 = vadd.xlane.f32.xlu0 %v265
    %v374 = vpop.xlane.xlu0 %373
    %375 = vadd.xlane.f32.xlu0 %v266
    %v376 = vpop.xlane.xlu0 %375
    %377 = vadd.xlane.f32.xlu0 %v267
    %v378 = vpop.xlane.xlu0 %377
    %379 = vadd.xlane.f32.xlu0 %v268
    %v380 = vpop.xlane.xlu0 %379
    %381 = vadd.xlane.f32.xlu0 %v269
    %v382 = vpop.xlane.xlu0 %381
    %383 = vadd.xlane.f32.xlu0 %v270
    %v384 = vpop.xlane.xlu0 %383
    %385 = vadd.xlane.f32.xlu0 %v271
    %v386 = vpop.xlane.xlu0 %385
    %387 = vadd.xlane.f32.xlu0 %v272
    %v388 = vpop.xlane.xlu0 %387
    %389 = vadd.xlane.f32.xlu0 %v273
    %v390 = vpop.xlane.xlu0 %389
    %391 = vadd.xlane.f32.xlu0 %v274
    %v392 = vpop.xlane.xlu0 %391
    %393 = vadd.xlane.f32.xlu0 %v275
    %v394 = vpop.xlane.xlu0 %393
    %395 = vadd.xlane.f32.xlu0 %v276
    %v396 = vpop.xlane.xlu0 %395
    %397 = vadd.xlane.f32.xlu0 %v277
    %v398 = vpop.xlane.xlu0 %397
    %399 = vadd.xlane.f32.xlu0 %v278
    %v400 = vpop.xlane.xlu0 %399
    %401 = vadd.xlane.f32.xlu0 %v279
    %v402 = vpop.xlane.xlu0 %401
    %403 = vadd.xlane.f32.xlu0 %v280
    %v404 = vpop.xlane.xlu0 %403
    %405 = vadd.xlane.f32.xlu0 %v281
    %v406 = vpop.xlane.xlu0 %405
    %407 = vadd.xlane.f32.xlu0 %v282
    %v408 = vpop.xlane.xlu0 %407
    %409 = vadd.xlane.f32.xlu0 %v283
    %v410 = vpop.xlane.xlu0 %409
    %411 = vadd.xlane.f32.xlu0 %v284
    %v412 = vpop.xlane.xlu0 %411
    %v413 = vmul.f32 %v94, 0.0078125
    %v414 = vmul.f32 %v96, 0.0078125
    %v415 = vmul.f32 %v98, 0.0078125
    %v416 = vmul.f32 %v100, 0.0078125
    %v417 = vmul.f32 %v102, 0.0078125
    %v418 = vmul.f32 %v104, 0.0078125
    %v419 = vmul.f32 %v106, 0.0078125
    %v420 = vmul.f32 %v108, 0.0078125
    %v421 = vmul.f32 %v110, 0.0078125
    %v422 = vmul.f32 %v112, 0.0078125
    %v423 = vmul.f32 %v114, 0.0078125
    %v424 = vmul.f32 %v116, 0.0078125
    %v425 = vmul.f32 %v118, 0.0078125
    %v426 = vmul.f32 %v120, 0.0078125
    %v427 = vmul.f32 %v122, 0.0078125
    %v428 = vmul.f32 %v124, 0.0078125
    %v429 = vmul.f32 %v126, 0.0078125
    %v430 = vmul.f32 %v128, 0.0078125
    %v431 = vmul.f32 %v130, 0.0078125
    %v432 = vmul.f32 %v132, 0.0078125
    %v433 = vmul.f32 %v134, 0.0078125
    %v434 = vmul.f32 %v136, 0.0078125
    %v435 = vmul.f32 %v138, 0.0078125
    %v436 = vmul.f32 %v140, 0.0078125
    %v437 = vmul.f32 %v142, 0.0078125
    %v438 = vmul.f32 %v144, 0.0078125
    %v439 = vmul.f32 %v146, 0.0078125
    %v440 = vmul.f32 %v148, 0.0078125
    %v441 = vmul.f32 %v150, 0.0078125
    %v442 = vmul.f32 %v152, 0.0078125
    %v443 = vmul.f32 %v154, 0.0078125
    %v444 = vmul.f32 %v156, 0.0078125
    %v445 = vmul.f32 %v158, 0.0078125
    %v446 = vmul.f32 %v160, 0.0078125
    %v447 = vmul.f32 %v162, 0.0078125
    %v448 = vmul.f32 %v164, 0.0078125
    %v449 = vmul.f32 %v166, 0.0078125
    %v450 = vmul.f32 %v168, 0.0078125
    %v451 = vmul.f32 %v170, 0.0078125
    %v452 = vmul.f32 %v172, 0.0078125
    %v453 = vmul.f32 %v174, 0.0078125
    %v454 = vmul.f32 %v176, 0.0078125
    %v455 = vmul.f32 %v178, 0.0078125
    %v456 = vmul.f32 %v180, 0.0078125
    %v457 = vmul.f32 %v182, 0.0078125
    %v458 = vmul.f32 %v184, 0.0078125
    %v459 = vmul.f32 %v186, 0.0078125
    %v460 = vmul.f32 %v188, 0.0078125
    %v461 = vmul.f32 %v190, 0.0078125
    %v462 = vmul.f32 %v192, 0.0078125
    %v463 = vmul.f32 %v194, 0.0078125
    %v464 = vmul.f32 %v196, 0.0078125
    %v465 = vmul.f32 %v198, 0.0078125
    %v466 = vmul.f32 %v200, 0.0078125
    %v467 = vmul.f32 %v202, 0.0078125
    %v468 = vmul.f32 %v204, 0.0078125
    %v469 = vmul.f32 %v206, 0.0078125
    %v470 = vmul.f32 %v208, 0.0078125
    %v471 = vmul.f32 %v210, 0.0078125
    %v472 = vmul.f32 %v212, 0.0078125
    %v473 = vmul.f32 %v214, 0.0078125
    %v474 = vmul.f32 %v216, 0.0078125
    %v475 = vmul.f32 %v218, 0.0078125
    %v476 = vmul.f32 %v220, 0.0078125
    %v477 = vmul.f32 %v286, 0.0078125
    %v478 = vmul.f32 %v288, 0.0078125
    %v479 = vmul.f32 %v290, 0.0078125
    %v480 = vmul.f32 %v292, 0.0078125
    %v481 = vmul.f32 %v294, 0.0078125
    %v482 = vmul.f32 %v296, 0.0078125
    %v483 = vmul.f32 %v298, 0.0078125
    %v484 = vmul.f32 %v300, 0.0078125
    %v485 = vmul.f32 %v302, 0.0078125
    %v486 = vmul.f32 %v304, 0.0078125
    %v487 = vmul.f32 %v306, 0.0078125
    %v488 = vmul.f32 %v308, 0.0078125
    %v489 = vmul.f32 %v310, 0.0078125
    %v490 = vmul.f32 %v312, 0.0078125
    %v491 = vmul.f32 %v314, 0.0078125
    %v492 = vmul.f32 %v316, 0.0078125
    %v493 = vmul.f32 %v318, 0.0078125
    %v494 = vmul.f32 %v320, 0.0078125
    %v495 = vmul.f32 %v322, 0.0078125
    %v496 = vmul.f32 %v324, 0.0078125
    %v497 = vmul.f32 %v326, 0.0078125
    %v498 = vmul.f32 %v328, 0.0078125
    %v499 = vmul.f32 %v330, 0.0078125
    %v500 = vmul.f32 %v332, 0.0078125
    %v501 = vmul.f32 %v334, 0.0078125
    %v502 = vmul.f32 %v336, 0.0078125
    %v503 = vmul.f32 %v338, 0.0078125
    %v504 = vmul.f32 %v340, 0.0078125
    %v505 = vmul.f32 %v342, 0.0078125
    %v506 = vmul.f32 %v344, 0.0078125
    %v507 = vmul.f32 %v346, 0.0078125
    %v508 = vmul.f32 %v348, 0.0078125
    %v509 = vmul.f32 %v350, 0.0078125
    %v510 = vmul.f32 %v352, 0.0078125
    %v511 = vmul.f32 %v354, 0.0078125
    %v512 = vmul.f32 %v356, 0.0078125
    %v513 = vmul.f32 %v358, 0.0078125
    %v514 = vmul.f32 %v360, 0.0078125
    %v515 = vmul.f32 %v362, 0.0078125
    %v516 = vmul.f32 %v364, 0.0078125
    %v517 = vmul.f32 %v366, 0.0078125
    %v518 = vmul.f32 %v368, 0.0078125
    %v519 = vmul.f32 %v370, 0.0078125
    %v520 = vmul.f32 %v372, 0.0078125
    %v521 = vmul.f32 %v374, 0.0078125
    %v522 = vmul.f32 %v376, 0.0078125
    %v523 = vmul.f32 %v378, 0.0078125
    %v524 = vmul.f32 %v380, 0.0078125
    %v525 = vmul.f32 %v382, 0.0078125
    %v526 = vmul.f32 %v384, 0.0078125
    %v527 = vmul.f32 %v386, 0.0078125
    %v528 = vmul.f32 %v388, 0.0078125
    %v529 = vmul.f32 %v390, 0.0078125
    %v530 = vmul.f32 %v392, 0.0078125
    %v531 = vmul.f32 %v394, 0.0078125
    %v532 = vmul.f32 %v396, 0.0078125
    %v533 = vmul.f32 %v398, 0.0078125
    %v534 = vmul.f32 %v400, 0.0078125
    %v535 = vmul.f32 %v402, 0.0078125
    %v536 = vmul.f32 %v404, 0.0078125
    %v537 = vmul.f32 %v406, 0.0078125
    %v538 = vmul.f32 %v408, 0.0078125
    %v539 = vmul.f32 %v410, 0.0078125
    %v540 = vmul.f32 %v412, 0.0078125
    %v541 = vmul.f32 %v413, %v413
    %v542 = vmul.f32 %v414, %v414
    %v543 = vmul.f32 %v415, %v415
    %v544 = vmul.f32 %v416, %v416
    %v545 = vmul.f32 %v417, %v417
    %v546 = vmul.f32 %v418, %v418
    %v547 = vmul.f32 %v419, %v419
    %v548 = vmul.f32 %v420, %v420
    %v549 = vmul.f32 %v421, %v421
    %v550 = vmul.f32 %v422, %v422
    %v551 = vmul.f32 %v423, %v423
    %v552 = vmul.f32 %v424, %v424
    %v553 = vmul.f32 %v425, %v425
    %v554 = vmul.f32 %v426, %v426
    %v555 = vmul.f32 %v427, %v427
    %v556 = vmul.f32 %v428, %v428
    %v557 = vmul.f32 %v429, %v429
    %v558 = vmul.f32 %v430, %v430
    %v559 = vmul.f32 %v431, %v431
    %v560 = vmul.f32 %v432, %v432
    %v561 = vmul.f32 %v433, %v433
    %v562 = vmul.f32 %v434, %v434
    %v563 = vmul.f32 %v435, %v435
    %v564 = vmul.f32 %v436, %v436
    %v565 = vmul.f32 %v437, %v437
    %v566 = vmul.f32 %v438, %v438
    %v567 = vmul.f32 %v439, %v439
    %v568 = vmul.f32 %v440, %v440
    %v569 = vmul.f32 %v441, %v441
    %v570 = vmul.f32 %v442, %v442
    %v571 = vmul.f32 %v443, %v443
    %v572 = vmul.f32 %v444, %v444
    %v573 = vmul.f32 %v445, %v445
    %v574 = vmul.f32 %v446, %v446
    %v575 = vmul.f32 %v447, %v447
    %v576 = vmul.f32 %v448, %v448
    %v577 = vmul.f32 %v449, %v449
    %v578 = vmul.f32 %v450, %v450
    %v579 = vmul.f32 %v451, %v451
    %v580 = vmul.f32 %v452, %v452
    %v581 = vmul.f32 %v453, %v453
    %v582 = vmul.f32 %v454, %v454
    %v583 = vmul.f32 %v455, %v455
    %v584 = vmul.f32 %v456, %v456
    %v585 = vmul.f32 %v457, %v457
    %v586 = vmul.f32 %v458, %v458
    %v587 = vmul.f32 %v459, %v459
    %v588 = vmul.f32 %v460, %v460
    %v589 = vmul.f32 %v461, %v461
    %v590 = vmul.f32 %v462, %v462
    %v591 = vmul.f32 %v463, %v463
    %v592 = vmul.f32 %v464, %v464
    %v593 = vmul.f32 %v465, %v465
    %v594 = vmul.f32 %v466, %v466
    %v595 = vmul.f32 %v467, %v467
    %v596 = vmul.f32 %v468, %v468
    %v597 = vmul.f32 %v469, %v469
    %v598 = vmul.f32 %v470, %v470
    %v599 = vmul.f32 %v471, %v471
    %v600 = vmul.f32 %v472, %v472
    %v601 = vmul.f32 %v473, %v473
    %v602 = vmul.f32 %v474, %v474
    %v603 = vmul.f32 %v475, %v475
    %v604 = vmul.f32 %v476, %v476
    %v605 = vsub.f32 %v477, %v541
    %v606 = vsub.f32 %v478, %v542
    %v607 = vsub.f32 %v479, %v543
    %v608 = vsub.f32 %v480, %v544
    %v609 = vsub.f32 %v481, %v545
    %v610 = vsub.f32 %v482, %v546
    %v611 = vsub.f32 %v483, %v547
    %v612 = vsub.f32 %v484, %v548
    %v613 = vsub.f32 %v485, %v549
    %v614 = vsub.f32 %v486, %v550
    %v615 = vsub.f32 %v487, %v551
    %v616 = vsub.f32 %v488, %v552
    %v617 = vsub.f32 %v489, %v553
    %v618 = vsub.f32 %v490, %v554
    %v619 = vsub.f32 %v491, %v555
    %v620 = vsub.f32 %v492, %v556
    %v621 = vsub.f32 %v493, %v557
    %v622 = vsub.f32 %v494, %v558
    %v623 = vsub.f32 %v495, %v559
    %v624 = vsub.f32 %v496, %v560
    %v625 = vsub.f32 %v497, %v561
    %v626 = vsub.f32 %v498, %v562
    %v627 = vsub.f32 %v499, %v563
    %v628 = vsub.f32 %v500, %v564
    %v629 = vsub.f32 %v501, %v565
    %v630 = vsub.f32 %v502, %v566
    %v631 = vsub.f32 %v503, %v567
    %v632 = vsub.f32 %v504, %v568
    %v633 = vsub.f32 %v505, %v569
    %v634 = vsub.f32 %v506, %v570
    %v635 = vsub.f32 %v507, %v571
    %v636 = vsub.f32 %v508, %v572
    %v637 = vsub.f32 %v509, %v573
    %v638 = vsub.f32 %v510, %v574
    %v639 = vsub.f32 %v511, %v575
    %v640 = vsub.f32 %v512, %v576
    %v641 = vsub.f32 %v513, %v577
    %v642 = vsub.f32 %v514, %v578
    %v643 = vsub.f32 %v515, %v579
    %v644 = vsub.f32 %v516, %v580
    %v645 = vsub.f32 %v517, %v581
    %v646 = vsub.f32 %v518, %v582
    %v647 = vsub.f32 %v519, %v583
    %v648 = vsub.f32 %v520, %v584
    %v649 = vsub.f32 %v521, %v585
    %v650 = vsub.f32 %v522, %v586
    %v651 = vsub.f32 %v523, %v587
    %v652 = vsub.f32 %v524, %v588
    %v653 = vsub.f32 %v525, %v589
    %v654 = vsub.f32 %v526, %v590
    %v655 = vsub.f32 %v527, %v591
    %v656 = vsub.f32 %v528, %v592
    %v657 = vsub.f32 %v529, %v593
    %v658 = vsub.f32 %v530, %v594
    %v659 = vsub.f32 %v531, %v595
    %v660 = vsub.f32 %v532, %v596
    %v661 = vsub.f32 %v533, %v597
    %v662 = vsub.f32 %v534, %v598
    %v663 = vsub.f32 %v535, %v599
    %v664 = vsub.f32 %v536, %v600
    %v665 = vsub.f32 %v537, %v601
    %v666 = vsub.f32 %v538, %v602
    %v667 = vsub.f32 %v539, %v603
    %v668 = vsub.f32 %v540, %v604
    %v669 = vmax.f32 %v605, 0.0
    %v670 = vmax.f32 %v606, 0.0
    %v671 = vmax.f32 %v607, 0.0
    %v672 = vmax.f32 %v608, 0.0
    %v673 = vmax.f32 %v609, 0.0
    %v674 = vmax.f32 %v610, 0.0
    %v675 = vmax.f32 %v611, 0.0
    %v676 = vmax.f32 %v612, 0.0
    %v677 = vmax.f32 %v613, 0.0
    %v678 = vmax.f32 %v614, 0.0
    %v679 = vmax.f32 %v615, 0.0
    %v680 = vmax.f32 %v616, 0.0
    %v681 = vmax.f32 %v617, 0.0
    %v682 = vmax.f32 %v618, 0.0
    %v683 = vmax.f32 %v619, 0.0
    %v684 = vmax.f32 %v620, 0.0
    %v685 = vmax.f32 %v621, 0.0
    %v686 = vmax.f32 %v622, 0.0
    %v687 = vmax.f32 %v623, 0.0
    %v688 = vmax.f32 %v624, 0.0
    %v689 = vmax.f32 %v625, 0.0
    %v690 = vmax.f32 %v626, 0.0
    %v691 = vmax.f32 %v627, 0.0
    %v692 = vmax.f32 %v628, 0.0
    %v693 = vmax.f32 %v629, 0.0
    %v694 = vmax.f32 %v630, 0.0
    %v695 = vmax.f32 %v631, 0.0
    %v696 = vmax.f32 %v632, 0.0
    %v697 = vmax.f32 %v633, 0.0
    %v698 = vmax.f32 %v634, 0.0
    %v699 = vmax.f32 %v635, 0.0
    %v700 = vmax.f32 %v636, 0.0
    %v701 = vmax.f32 %v637, 0.0
    %v702 = vmax.f32 %v638, 0.0
    %v703 = vmax.f32 %v639, 0.0
    %v704 = vmax.f32 %v640, 0.0
    %v705 = vmax.f32 %v641, 0.0
    %v706 = vmax.f32 %v642, 0.0
    %v707 = vmax.f32 %v643, 0.0
    %v708 = vmax.f32 %v644, 0.0
    %v709 = vmax.f32 %v645, 0.0
    %v710 = vmax.f32 %v646, 0.0
    %v711 = vmax.f32 %v647, 0.0
    %v712 = vmax.f32 %v648, 0.0
    %v713 = vmax.f32 %v649, 0.0
    %v714 = vmax.f32 %v650, 0.0
    %v715 = vmax.f32 %v651, 0.0
    %v716 = vmax.f32 %v652, 0.0
    %v717 = vmax.f32 %v653, 0.0
    %v718 = vmax.f32 %v654, 0.0
    %v719 = vmax.f32 %v655, 0.0
    %v720 = vmax.f32 %v656, 0.0
    %v721 = vmax.f32 %v657, 0.0
    %v722 = vmax.f32 %v658, 0.0
    %v723 = vmax.f32 %v659, 0.0
    %v724 = vmax.f32 %v660, 0.0
    %v725 = vmax.f32 %v661, 0.0
    %v726 = vmax.f32 %v662, 0.0
    %v727 = vmax.f32 %v663, 0.0
    %v728 = vmax.f32 %v664, 0.0
    %v729 = vmax.f32 %v665, 0.0
    %v730 = vmax.f32 %v666, 0.0
    %v731 = vmax.f32 %v667, 0.0
    %v732 = vmax.f32 %v668, 0.0
    %v733 = vadd.f32 %v669, 1e-06
    %v734 = vadd.f32 %v670, 1e-06
    %v735 = vadd.f32 %v671, 1e-06
    %v736 = vadd.f32 %v672, 1e-06
    %v737 = vadd.f32 %v673, 1e-06
    %v738 = vadd.f32 %v674, 1e-06
    %v739 = vadd.f32 %v675, 1e-06
    %v740 = vadd.f32 %v676, 1e-06
    %v741 = vadd.f32 %v677, 1e-06
    %v742 = vadd.f32 %v678, 1e-06
    %v743 = vadd.f32 %v679, 1e-06
    %v744 = vadd.f32 %v680, 1e-06
    %v745 = vadd.f32 %v681, 1e-06
    %v746 = vadd.f32 %v682, 1e-06
    %v747 = vadd.f32 %v683, 1e-06
    %v748 = vadd.f32 %v684, 1e-06
    %v749 = vadd.f32 %v685, 1e-06
    %v750 = vadd.f32 %v686, 1e-06
    %v751 = vadd.f32 %v687, 1e-06
    %v752 = vadd.f32 %v688, 1e-06
    %v753 = vadd.f32 %v689, 1e-06
    %v754 = vadd.f32 %v690, 1e-06
    %v755 = vadd.f32 %v691, 1e-06
    %v756 = vadd.f32 %v692, 1e-06
    %v757 = vadd.f32 %v693, 1e-06
    %v758 = vadd.f32 %v694, 1e-06
    %v759 = vadd.f32 %v695, 1e-06
    %v760 = vadd.f32 %v696, 1e-06
    %v761 = vadd.f32 %v697, 1e-06
    %v762 = vadd.f32 %v698, 1e-06
    %v763 = vadd.f32 %v699, 1e-06
    %v764 = vadd.f32 %v700, 1e-06
    %v765 = vadd.f32 %v701, 1e-06
    %v766 = vadd.f32 %v702, 1e-06
    %v767 = vadd.f32 %v703, 1e-06
    %v768 = vadd.f32 %v704, 1e-06
    %v769 = vadd.f32 %v705, 1e-06
    %v770 = vadd.f32 %v706, 1e-06
    %v771 = vadd.f32 %v707, 1e-06
    %v772 = vadd.f32 %v708, 1e-06
    %v773 = vadd.f32 %v709, 1e-06
    %v774 = vadd.f32 %v710, 1e-06
    %v775 = vadd.f32 %v711, 1e-06
    %v776 = vadd.f32 %v712, 1e-06
    %v777 = vadd.f32 %v713, 1e-06
    %v778 = vadd.f32 %v714, 1e-06
    %v779 = vadd.f32 %v715, 1e-06
    %v780 = vadd.f32 %v716, 1e-06
    %v781 = vadd.f32 %v717, 1e-06
    %v782 = vadd.f32 %v718, 1e-06
    %v783 = vadd.f32 %v719, 1e-06
    %v784 = vadd.f32 %v720, 1e-06
    %v785 = vadd.f32 %v721, 1e-06
    %v786 = vadd.f32 %v722, 1e-06
    %v787 = vadd.f32 %v723, 1e-06
    %v788 = vadd.f32 %v724, 1e-06
    %v789 = vadd.f32 %v725, 1e-06
    %v790 = vadd.f32 %v726, 1e-06
    %v791 = vadd.f32 %v727, 1e-06
    %v792 = vadd.f32 %v728, 1e-06
    %v793 = vadd.f32 %v729, 1e-06
    %v794 = vadd.f32 %v730, 1e-06
    %v795 = vadd.f32 %v731, 1e-06
    %v796 = vadd.f32 %v732, 1e-06
    %v797 = vrsqrt.pop %v733
    %v798 = vrsqrt.pop %v734
    %v799 = vrsqrt.pop %v735
    %v800 = vrsqrt.pop %v736
    %v801 = vrsqrt.pop %v737
    %v802 = vrsqrt.pop %v738
    %v803 = vrsqrt.pop %v739
    %v804 = vrsqrt.pop %v740
    %v805 = vrsqrt.pop %v741
    %v806 = vrsqrt.pop %v742
    %v807 = vrsqrt.pop %v743
    %v808 = vrsqrt.pop %v744
    %v809 = vrsqrt.pop %v745
    %v810 = vrsqrt.pop %v746
    %v811 = vrsqrt.pop %v747
    %v812 = vrsqrt.pop %v748
    %v813 = vrsqrt.pop %v749
    %v814 = vrsqrt.pop %v750
    %v815 = vrsqrt.pop %v751
    %v816 = vrsqrt.pop %v752
    %v817 = vrsqrt.pop %v753
    %v818 = vrsqrt.pop %v754
    %v819 = vrsqrt.pop %v755
    %v820 = vrsqrt.pop %v756
    %v821 = vrsqrt.pop %v757
    %v822 = vrsqrt.pop %v758
    %v823 = vrsqrt.pop %v759
    %v824 = vrsqrt.pop %v760
    %v825 = vrsqrt.pop %v761
    %v826 = vrsqrt.pop %v762
    %v827 = vrsqrt.pop %v763
    %v828 = vrsqrt.pop %v764
    %v829 = vrsqrt.pop %v765
    %v830 = vrsqrt.pop %v766
    %v831 = vrsqrt.pop %v767
    %v832 = vrsqrt.pop %v768
    %v833 = vrsqrt.pop %v769
    %v834 = vrsqrt.pop %v770
    %v835 = vrsqrt.pop %v771
    %v836 = vrsqrt.pop %v772
    %v837 = vrsqrt.pop %v773
    %v838 = vrsqrt.pop %v774
    %v839 = vrsqrt.pop %v775
    %v840 = vrsqrt.pop %v776
    %v841 = vrsqrt.pop %v777
    %v842 = vrsqrt.pop %v778
    %v843 = vrsqrt.pop %v779
    %v844 = vrsqrt.pop %v780
    %v845 = vrsqrt.pop %v781
    %v846 = vrsqrt.pop %v782
    %v847 = vrsqrt.pop %v783
    %v848 = vrsqrt.pop %v784
    %v849 = vrsqrt.pop %v785
    %v850 = vrsqrt.pop %v786
    %v851 = vrsqrt.pop %v787
    %v852 = vrsqrt.pop %v788
    %v853 = vrsqrt.pop %v789
    %v854 = vrsqrt.pop %v790
    %v855 = vrsqrt.pop %v791
    %v856 = vrsqrt.pop %v792
    %v857 = vrsqrt.pop %v793
    %v858 = vrsqrt.pop %v794
    %v859 = vrsqrt.pop %v795
    %v860 = vrsqrt.pop %v796
    %v861 = vsub.f32 %v29, %v413
    %v862 = vsub.f32 %v30, %v414
    %v863 = vsub.f32 %v31, %v415
    %v864 = vsub.f32 %v32, %v416
    %v865 = vsub.f32 %v33, %v417
    %v866 = vsub.f32 %v34, %v418
    %v867 = vsub.f32 %v35, %v419
    %v868 = vsub.f32 %v36, %v420
    %v869 = vsub.f32 %v37, %v421
    %v870 = vsub.f32 %v38, %v422
    %v871 = vsub.f32 %v39, %v423
    %v872 = vsub.f32 %v40, %v424
    %v873 = vsub.f32 %v41, %v425
    %v874 = vsub.f32 %v42, %v426
    %v875 = vsub.f32 %v43, %v427
    %v876 = vsub.f32 %v44, %v428
    %v877 = vsub.f32 %v45, %v429
    %v878 = vsub.f32 %v46, %v430
    %v879 = vsub.f32 %v47, %v431
    %v880 = vsub.f32 %v48, %v432
    %v881 = vsub.f32 %v49, %v433
    %v882 = vsub.f32 %v50, %v434
    %v883 = vsub.f32 %v51, %v435
    %v884 = vsub.f32 %v52, %v436
    %v885 = vsub.f32 %v53, %v437
    %v886 = vsub.f32 %v54, %v438
    %v887 = vsub.f32 %v55, %v439
    %v888 = vsub.f32 %v56, %v440
    %v889 = vsub.f32 %v57, %v441
    %v890 = vsub.f32 %v58, %v442
    %v891 = vsub.f32 %v59, %v443
    %v892 = vsub.f32 %v60, %v444
    %v893 = vsub.f32 %v61, %v445
    %v894 = vsub.f32 %v62, %v446
    %v895 = vsub.f32 %v63, %v447
    %v896 = vsub.f32 %v64, %v448
    %v897 = vsub.f32 %v65, %v449
    %v898 = vsub.f32 %v66, %v450
    %v899 = vsub.f32 %v67, %v451
    %v900 = vsub.f32 %v68, %v452
    %v901 = vsub.f32 %v69, %v453
    %v902 = vsub.f32 %v70, %v454
    %v903 = vsub.f32 %v71, %v455
    %v904 = vsub.f32 %v72, %v456
    %v905 = vsub.f32 %v73, %v457
    %v906 = vsub.f32 %v74, %v458
    %v907 = vsub.f32 %v75, %v459
    %v908 = vsub.f32 %v76, %v460
    %v909 = vsub.f32 %v77, %v461
    %v910 = vsub.f32 %v78, %v462
    %v911 = vsub.f32 %v79, %v463
    %v912 = vsub.f32 %v80, %v464
    %v913 = vsub.f32 %v81, %v465
    %v914 = vsub.f32 %v82, %v466
    %v915 = vsub.f32 %v83, %v467
    %v916 = vsub.f32 %v84, %v468
    %v917 = vsub.f32 %v85, %v469
    %v918 = vsub.f32 %v86, %v470
    %v919 = vsub.f32 %v87, %v471
    %v920 = vsub.f32 %v88, %v472
    %v921 = vsub.f32 %v89, %v473
    %v922 = vsub.f32 %v90, %v474
    %v923 = vsub.f32 %v91, %v475
    %v924 = vsub.f32 %v92, %v476
    %v925 = vmul.f32 %v861, %v797
    %v926 = vmul.f32 %v862, %v798
    %v927 = vmul.f32 %v863, %v799
    %v928 = vmul.f32 %v864, %v800
    %v929 = vmul.f32 %v865, %v801
    %v930 = vmul.f32 %v866, %v802
    %v931 = vmul.f32 %v867, %v803
    %v932 = vmul.f32 %v868, %v804
    %v933 = vmul.f32 %v869, %v805
    %v934 = vmul.f32 %v870, %v806
    %v935 = vmul.f32 %v871, %v807
    %v936 = vmul.f32 %v872, %v808
    %v937 = vmul.f32 %v873, %v809
    %v938 = vmul.f32 %v874, %v810
    %v939 = vmul.f32 %v875, %v811
    %v940 = vmul.f32 %v876, %v812
    %v941 = vmul.f32 %v877, %v813
    %v942 = vmul.f32 %v878, %v814
    %v943 = vmul.f32 %v879, %v815
    %v944 = vmul.f32 %v880, %v816
    %v945 = vmul.f32 %v881, %v817
    %v946 = vmul.f32 %v882, %v818
    %v947 = vmul.f32 %v883, %v819
    %v948 = vmul.f32 %v884, %v820
    %v949 = vmul.f32 %v885, %v821
    %v950 = vmul.f32 %v886, %v822
    %v951 = vmul.f32 %v887, %v823
    %v952 = vmul.f32 %v888, %v824
    %v953 = vmul.f32 %v889, %v825
    %v954 = vmul.f32 %v890, %v826
    %v955 = vmul.f32 %v891, %v827
    %v956 = vmul.f32 %v892, %v828
    %v957 = vmul.f32 %v893, %v829
    %v958 = vmul.f32 %v894, %v830
    %v959 = vmul.f32 %v895, %v831
    %v960 = vmul.f32 %v896, %v832
    %v961 = vmul.f32 %v897, %v833
    %v962 = vmul.f32 %v898, %v834
    %v963 = vmul.f32 %v899, %v835
    %v964 = vmul.f32 %v900, %v836
    %v965 = vmul.f32 %v901, %v837
    %v966 = vmul.f32 %v902, %v838
    %v967 = vmul.f32 %v903, %v839
    %v968 = vmul.f32 %v904, %v840
    %v969 = vmul.f32 %v905, %v841
    %v970 = vmul.f32 %v906, %v842
    %v971 = vmul.f32 %v907, %v843
    %v972 = vmul.f32 %v908, %v844
    %v973 = vmul.f32 %v909, %v845
    %v974 = vmul.f32 %v910, %v846
    %v975 = vmul.f32 %v911, %v847
    %v976 = vmul.f32 %v912, %v848
    %v977 = vmul.f32 %v913, %v849
    %v978 = vmul.f32 %v914, %v850
    %v979 = vmul.f32 %v915, %v851
    %v980 = vmul.f32 %v916, %v852
    %v981 = vmul.f32 %v917, %v853
    %v982 = vmul.f32 %v918, %v854
    %v983 = vmul.f32 %v919, %v855
    %v984 = vmul.f32 %v920, %v856
    %v985 = vmul.f32 %v921, %v857
    %v986 = vmul.f32 %v922, %v858
    %v987 = vmul.f32 %v923, %v859
    %v988 = vmul.f32 %v924, %v860
    %v989 = vld [vmem:[%s1] sm:$0x1]
    %v991 = vlaneseq
    %v992 = vshrl.u32 %v991, 7
    %v993 = vsub.s32 0, %v992
    %v994 = vrot.slane %v989, %v993
    %v996 = vmul.f32 %v925, %v994
    %v997 = vmul.f32 %v926, %v994
    %v998 = vmul.f32 %v927, %v994
    %v999 = vmul.f32 %v928, %v994
    %v1000 = vmul.f32 %v929, %v994
    %v1001 = vmul.f32 %v930, %v994
    %v1002 = vmul.f32 %v931, %v994
    %v1003 = vmul.f32 %v932, %v994
    %v1004 = vmul.f32 %v933, %v994
    %v1005 = vmul.f32 %v934, %v994
    %v1006 = vmul.f32 %v935, %v994
    %v1007 = vmul.f32 %v936, %v994
    %v1008 = vmul.f32 %v937, %v994
    %v1009 = vmul.f32 %v938, %v994
    %v1010 = vmul.f32 %v939, %v994
    %v1011 = vmul.f32 %v940, %v994
    %v1012 = vmul.f32 %v941, %v994
    %v1013 = vmul.f32 %v942, %v994
    %v1014 = vmul.f32 %v943, %v994
    %v1015 = vmul.f32 %v944, %v994
    %v1016 = vmul.f32 %v945, %v994
    %v1017 = vmul.f32 %v946, %v994
    %v1018 = vmul.f32 %v947, %v994
    %v1019 = vmul.f32 %v948, %v994
    %v1020 = vmul.f32 %v949, %v994
    %v1021 = vmul.f32 %v950, %v994
    %v1022 = vmul.f32 %v951, %v994
    %v1023 = vmul.f32 %v952, %v994
    %v1024 = vmul.f32 %v953, %v994
    %v1025 = vmul.f32 %v954, %v994
    %v1026 = vmul.f32 %v955, %v994
    %v1027 = vmul.f32 %v956, %v994
    %v1028 = vmul.f32 %v957, %v994
    %v1029 = vmul.f32 %v958, %v994
    %v1030 = vmul.f32 %v959, %v994
    %v1031 = vmul.f32 %v960, %v994
    %v1032 = vmul.f32 %v961, %v994
    %v1033 = vmul.f32 %v962, %v994
    %v1034 = vmul.f32 %v963, %v994
    %v1035 = vmul.f32 %v964, %v994
    %v1036 = vmul.f32 %v965, %v994
    %v1037 = vmul.f32 %v966, %v994
    %v1038 = vmul.f32 %v967, %v994
    %v1039 = vmul.f32 %v968, %v994
    %v1040 = vmul.f32 %v969, %v994
    %v1041 = vmul.f32 %v970, %v994
    %v1042 = vmul.f32 %v971, %v994
    %v1043 = vmul.f32 %v972, %v994
    %v1044 = vmul.f32 %v973, %v994
    %v1045 = vmul.f32 %v974, %v994
    %v1046 = vmul.f32 %v975, %v994
    %v1047 = vmul.f32 %v976, %v994
    %v1048 = vmul.f32 %v977, %v994
    %v1049 = vmul.f32 %v978, %v994
    %v1050 = vmul.f32 %v979, %v994
    %v1051 = vmul.f32 %v980, %v994
    %v1052 = vmul.f32 %v981, %v994
    %v1053 = vmul.f32 %v982, %v994
    %v1054 = vmul.f32 %v983, %v994
    %v1055 = vmul.f32 %v984, %v994
    %v1056 = vmul.f32 %v985, %v994
    %v1057 = vmul.f32 %v986, %v994
    %v1058 = vmul.f32 %v987, %v994
    %v1059 = vmul.f32 %v988, %v994
    %v1060 = vld [vmem:[%s2] sm:$0x1]
    %v1062 = vlaneseq
    %v1063 = vshrl.u32 %v1062, 7
    %v1064 = vsub.s32 0, %v1063
    %v1065 = vrot.slane %v1060, %v1064
    %v1067 = vadd.f32 %v996, %v1065
    %v1068 = vadd.f32 %v997, %v1065
    %v1069 = vadd.f32 %v998, %v1065
    %v1070 = vadd.f32 %v999, %v1065
    %v1071 = vadd.f32 %v1000, %v1065
    %v1072 = vadd.f32 %v1001, %v1065
    %v1073 = vadd.f32 %v1002, %v1065
    %v1074 = vadd.f32 %v1003, %v1065
    %v1075 = vadd.f32 %v1004, %v1065
    %v1076 = vadd.f32 %v1005, %v1065
    %v1077 = vadd.f32 %v1006, %v1065
    %v1078 = vadd.f32 %v1007, %v1065
    %v1079 = vadd.f32 %v1008, %v1065
    %v1080 = vadd.f32 %v1009, %v1065
    %v1081 = vadd.f32 %v1010, %v1065
    %v1082 = vadd.f32 %v1011, %v1065
    %v1083 = vadd.f32 %v1012, %v1065
    %v1084 = vadd.f32 %v1013, %v1065
    %v1085 = vadd.f32 %v1014, %v1065
    %v1086 = vadd.f32 %v1015, %v1065
    %v1087 = vadd.f32 %v1016, %v1065
    %v1088 = vadd.f32 %v1017, %v1065
    %v1089 = vadd.f32 %v1018, %v1065
    %v1090 = vadd.f32 %v1019, %v1065
    %v1091 = vadd.f32 %v1020, %v1065
    %v1092 = vadd.f32 %v1021, %v1065
    %v1093 = vadd.f32 %v1022, %v1065
    %v1094 = vadd.f32 %v1023, %v1065
    %v1095 = vadd.f32 %v1024, %v1065
    %v1096 = vadd.f32 %v1025, %v1065
    %v1097 = vadd.f32 %v1026, %v1065
    %v1098 = vadd.f32 %v1027, %v1065
    %v1099 = vadd.f32 %v1028, %v1065
    %v1100 = vadd.f32 %v1029, %v1065
    %v1101 = vadd.f32 %v1030, %v1065
    %v1102 = vadd.f32 %v1031, %v1065
    %v1103 = vadd.f32 %v1032, %v1065
    %v1104 = vadd.f32 %v1033, %v1065
    %v1105 = vadd.f32 %v1034, %v1065
    %v1106 = vadd.f32 %v1035, %v1065
    %v1107 = vadd.f32 %v1036, %v1065
    %v1108 = vadd.f32 %v1037, %v1065
    %v1109 = vadd.f32 %v1038, %v1065
    %v1110 = vadd.f32 %v1039, %v1065
    %v1111 = vadd.f32 %v1040, %v1065
    %v1112 = vadd.f32 %v1041, %v1065
    %v1113 = vadd.f32 %v1042, %v1065
    %v1114 = vadd.f32 %v1043, %v1065
    %v1115 = vadd.f32 %v1044, %v1065
    %v1116 = vadd.f32 %v1045, %v1065
    %v1117 = vadd.f32 %v1046, %v1065
    %v1118 = vadd.f32 %v1047, %v1065
    %v1119 = vadd.f32 %v1048, %v1065
    %v1120 = vadd.f32 %v1049, %v1065
    %v1121 = vadd.f32 %v1050, %v1065
    %v1122 = vadd.f32 %v1051, %v1065
    %v1123 = vadd.f32 %v1052, %v1065
    %v1124 = vadd.f32 %v1053, %v1065
    %v1125 = vadd.f32 %v1054, %v1065
    %v1126 = vadd.f32 %v1055, %v1065
    %v1127 = vadd.f32 %v1056, %v1065
    %v1128 = vadd.f32 %v1057, %v1065
    %v1129 = vadd.f32 %v1058, %v1065
    %v1130 = vadd.f32 %v1059, %v1065
    %1131 = vst [vmem:[#allocation5] sm:$0xff] %v1067
    %1132 = vst [vmem:[#allocation5 + $0x8] sm:$0xff] %v1068
    %1133 = vst [vmem:[#allocation5 + $0x10] sm:$0xff] %v1069
    %1134 = vst [vmem:[#allocation5 + $0x18] sm:$0xff] %v1070
    %1135 = vst [vmem:[#allocation5 + $0x20] sm:$0xff] %v1071
    %1136 = vst [vmem:[#allocation5 + $0x28] sm:$0xff] %v1072
    %1137 = vst [vmem:[#allocation5 + $0x30] sm:$0xff] %v1073
    %1138 = vst [vmem:[#allocation5 + $0x38] sm:$0xff] %v1074
    %1139 = vst [vmem:[#allocation5 + $0x40] sm:$0xff] %v1075
    %1140 = vst [vmem:[#allocation5 + $0x48] sm:$0xff] %v1076
    %1141 = vst [vmem:[#allocation5 + $0x50] sm:$0xff] %v1077
    %1142 = vst [vmem:[#allocation5 + $0x58] sm:$0xff] %v1078
    %1143 = vst [vmem:[#allocation5 + $0x60] sm:$0xff] %v1079
    %1144 = vst [vmem:[#allocation5 + $0x68] sm:$0xff] %v1080
    %1145 = vst [vmem:[#allocation5 + $0x70] sm:$0xff] %v1081
    %1146 = vst [vmem:[#allocation5 + $0x78] sm:$0xff] %v1082
    %1147 = vst [vmem:[#allocation5 + $0x80] sm:$0xff] %v1083
    %1148 = vst [vmem:[#allocation5 + $0x88] sm:$0xff] %v1084
    %1149 = vst [vmem:[#allocation5 + $0x90] sm:$0xff] %v1085
    %1150 = vst [vmem:[#allocation5 + $0x98] sm:$0xff] %v1086
    %1151 = vst [vmem:[#allocation5 + $0xa0] sm:$0xff] %v1087
    %1152 = vst [vmem:[#allocation5 + $0xa8] sm:$0xff] %v1088
    %1153 = vst [vmem:[#allocation5 + $0xb0] sm:$0xff] %v1089
    %1154 = vst [vmem:[#allocation5 + $0xb8] sm:$0xff] %v1090
    %1155 = vst [vmem:[#allocation5 + $0xc0] sm:$0xff] %v1091
    %1156 = vst [vmem:[#allocation5 + $0xc8] sm:$0xff] %v1092
    %1157 = vst [vmem:[#allocation5 + $0xd0] sm:$0xff] %v1093
    %1158 = vst [vmem:[#allocation5 + $0xd8] sm:$0xff] %v1094
    %1159 = vst [vmem:[#allocation5 + $0xe0] sm:$0xff] %v1095
    %1160 = vst [vmem:[#allocation5 + $0xe8] sm:$0xff] %v1096
    %1161 = vst [vmem:[#allocation5 + $0xf0] sm:$0xff] %v1097
    %1162 = vst [vmem:[#allocation5 + $0xf8] sm:$0xff] %v1098
    %1163 = vst [vmem:[#allocation5 + $0x100] sm:$0xff] %v1099
    %1164 = vst [vmem:[#allocation5 + $0x108] sm:$0xff] %v1100
    %1165 = vst [vmem:[#allocation5 + $0x110] sm:$0xff] %v1101
    %1166 = vst [vmem:[#allocation5 + $0x118] sm:$0xff] %v1102
    %1167 = vst [vmem:[#allocation5 + $0x120] sm:$0xff] %v1103
    %1168 = vst [vmem:[#allocation5 + $0x128] sm:$0xff] %v1104
    %1169 = vst [vmem:[#allocation5 + $0x130] sm:$0xff] %v1105
    %1170 = vst [vmem:[#allocation5 + $0x138] sm:$0xff] %v1106
    %1171 = vst [vmem:[#allocation5 + $0x140] sm:$0xff] %v1107
    %1172 = vst [vmem:[#allocation5 + $0x148] sm:$0xff] %v1108
    %1173 = vst [vmem:[#allocation5 + $0x150] sm:$0xff] %v1109
    %1174 = vst [vmem:[#allocation5 + $0x158] sm:$0xff] %v1110
    %1175 = vst [vmem:[#allocation5 + $0x160] sm:$0xff] %v1111
    %1176 = vst [vmem:[#allocation5 + $0x168] sm:$0xff] %v1112
    %1177 = vst [vmem:[#allocation5 + $0x170] sm:$0xff] %v1113
    %1178 = vst [vmem:[#allocation5 + $0x178] sm:$0xff] %v1114
    %1179 = vst [vmem:[#allocation5 + $0x180] sm:$0xff] %v1115
    %1180 = vst [vmem:[#allocation5 + $0x188] sm:$0xff] %v1116
    %1181 = vst [vmem:[#allocation5 + $0x190] sm:$0xff] %v1117
    %1182 = vst [vmem:[#allocation5 + $0x198] sm:$0xff] %v1118
    %1183 = vst [vmem:[#allocation5 + $0x1a0] sm:$0xff] %v1119
    %1184 = vst [vmem:[#allocation5 + $0x1a8] sm:$0xff] %v1120
    %1185 = vst [vmem:[#allocation5 + $0x1b0] sm:$0xff] %v1121
    %1186 = vst [vmem:[#allocation5 + $0x1b8] sm:$0xff] %v1122
    %1187 = vst [vmem:[#allocation5 + $0x1c0] sm:$0xff] %v1123
    %1188 = vst [vmem:[#allocation5 + $0x1c8] sm:$0xff] %v1124
    %1189 = vst [vmem:[#allocation5 + $0x1d0] sm:$0xff] %v1125
    %1190 = vst [vmem:[#allocation5 + $0x1d8] sm:$0xff] %v1126
    %1191 = vst [vmem:[#allocation5 + $0x1e0] sm:$0xff] %v1127
    %1192 = vst [vmem:[#allocation5 + $0x1e8] sm:$0xff] %v1128
    %1193 = vst [vmem:[#allocation5 + $0x1f0] sm:$0xff] %v1129
    %1194 = vst [vmem:[#allocation5 + $0x1f8] sm:$0xff] %v1130
    // Predicated region
    $region18: #{tpu_custom_call.1} parent=1 // pred_check
      _
    $region19: #{tpu_custom_call.1} parent=1 // pred_check_branch
      %1196 = sbr.rel (0) target = $region21
    $region20: #{tpu_custom_call.1} parent=1 // pred_region
      %s1198 = ssub.s32 8192, 8192
      %1199 = vsyncadd [#allocation4], %s1198
      %s1200 = sshll.u32 [#allocation5], 4
      %s1201 = int_to_ptr.vmem [resolvable:$true] %s1200
      %1206 = dma.vmem_to_hbm [thread:$0]  %s1201, 8192, %s3, [#allocation4], 128, 128, 8
    $region21: #{tpu_custom_call.1} parent=1 // pred_fallthru
      _
    // Predicated region
    $region22: #{tpu_custom_call.1} parent=1 // pred_check
      _
    $region23: #{tpu_custom_call.1} parent=1 // pred_check_branch
      %1208 = sbr.rel (0) target = $region25
    $region24: #{tpu_custom_call.1} parent=1 // pred_region
      %1209 = dma.done [#allocation4], 8192
    $region25: #{tpu_custom_call.1} parent=1 // pred_fallthru
      _
    %1210 = vsyncpa [#allocation3], 1
    %1211 = vsyncpa [#allocation4], 1

</llo_original>
